<compile_context>
chip_gen: v7x
topology: tpu7x:2x2x1
jax: 0.10.0
libtpu: 0.0.40
codegen_flags: <defaults>
</compile_context>

<pallas_src>
import jax
import jax.numpy as jnp
from jax.experimental import pallas as pl
from jax.experimental.pallas import tpu as pltpu


def _token_embedding_kernel(x_ref, w_ref, out_ref):
    # x_ref:   (bb, L + 2, c_in)   circularly padded input block
    # w_ref:   (3, c_in, d_model)  conv taps, transposed to (c_in, d_model) each
    # out_ref: (bb, L, d_model)
    bb, l_pad, c_in = x_ref.shape
    seq_len = l_pad - 2
    d_model = out_ref.shape[-1]

    acc = jnp.zeros((bb * seq_len, d_model), jnp.float32)
    for k in range(3):  # static, unrolled: the 3 conv taps
        xk = x_ref[:, pl.ds(k, seq_len), :].reshape(bb * seq_len, c_in)
        acc = acc + jnp.dot(xk, w_ref[k], preferred_element_type=jnp.float32)
    out_ref[...] = acc.reshape(bb, seq_len, d_model).astype(out_ref.dtype)


def token_embedding(x, weight):
    """x: [B, L, c_in]; weight: [3, c_in, d_model] (torch Conv1d weight
    (d_model, c_in, 3) transposed to tap-major (3, c_in, d_model)).
    Returns [B, L, d_model] in x.dtype."""
    B, L, c_in = x.shape
    d_model = weight.shape[-1]

    # Circular padding along the sequence axis (padding=1 each side).
    x_pad = jnp.concatenate([x[:, -1:, :], x, x[:, :1, :]], axis=1)  # (B, L+2, c_in)

    # Batch block: >= 2 grid steps when possible (v7x megacore), otherwise one
    # big block. Keep blocks evenly dividing B.
    bb = B if B == 1 else max(1, B // 2)
    while B % bb:
        bb -= 1
    grid = (B // bb,)

    grid_spec = pltpu.PrefetchScalarGridSpec(
        num_scalar_prefetch=0,
        grid=grid,
        in_specs=[
            pl.BlockSpec((bb, L + 2, c_in), lambda i: (i, 0, 0)),
            pl.BlockSpec((3, c_in, d_model), lambda i: (0, 0, 0)),
        ],
        out_specs=pl.BlockSpec((bb, L, d_model), lambda i: (i, 0, 0)),
    )

    return pl.pallas_call(
        _token_embedding_kernel,
        out_shape=jax.ShapeDtypeStruct((B, L, d_model), x.dtype),
        grid_spec=grid_spec,
        compiler_params=pltpu.CompilerParams(
            dimension_semantics=("parallel",)),
    )(x_pad, weight)


if __name__ == "__main__":
    # Module config: c_in=4, d_model=32; input x: [batch=2, seq=16, c_in=4].
    B, L, c_in, d_model = 2, 16, 4, 32

    key = jax.random.PRNGKey(0)
    kx, kw = jax.random.split(key)
    x = jax.random.normal(kx, (B, L, c_in), dtype=jnp.float32)

    # Kaiming-normal init (mode='fan_in', nonlinearity='leaky_relu'), like the module.
    fan_in = c_in * 3
    gain = (2.0 / (1.0 + 0.01 ** 2)) ** 0.5
    std = gain / (fan_in ** 0.5)
    # Torch layout (d_model, c_in, 3), then tap-major (3, c_in, d_model) for the kernel.
    w_torch = std * jax.random.normal(kw, (d_model, c_in, 3), dtype=jnp.float32)
    w = jnp.transpose(w_torch, (2, 1, 0))

    y = token_embedding(x, w)
    jax.block_until_ready(y)

    # Reference: circular pad + VALID conv, matching
    # nn.Conv1d(kernel_size=3, padding=1, padding_mode='circular', bias=False).
    x_cf = jnp.transpose(x, (0, 2, 1))                                   # (B, c_in, L)
    x_cf_pad = jnp.concatenate([x_cf[:, :, -1:], x_cf, x_cf[:, :, :1]], axis=2)
    y_ref = jax.lax.conv_general_dilated(
        x_cf_pad, w_torch, window_strides=(1,), padding="VALID",
        dimension_numbers=("NCH", "OIH", "NCH"))
    y_ref = jnp.transpose(y_ref, (0, 2, 1))                              # (B, L, d_model)

    assert y.shape == (B, L, d_model)
    assert y.dtype == x.dtype
    assert jnp.allclose(y, y_ref, atol=1e-5, rtol=1e-5)

    print("KERNEL_OK")
</pallas_src>

<mosaic_0001>
module attributes {stable_mosaic.version = 11 : i64} {
  func.func @_token_embedding_kernel(%arg0: i32, %arg1: memref<1x18x4xf32, #tpu.memory_space<vmem>>, %arg2: memref<3x4x32xf32, #tpu.memory_space<vmem>>, %arg3: memref<1x16x32xf32, #tpu.memory_space<vmem>>) attributes {dimension_semantics = [#tpu.dimension_semantics<parallel>], iteration_bounds = array<i64: 2>, scalar_prefetch = 0 : i64, scratch_operands = 0 : i64, tpu.core_type = #tpu.core_type<tc>, window_params = [{transform_indices = @transform_0, window_bounds = array<i64: 1, 18, 4>}, {pipeline_mode = #tpu.pipeline_mode<synchronous>, transform_indices = @transform_1, window_bounds = array<i64: 3, 4, 32>}, {transform_indices = @transform_2, window_bounds = array<i64: 1, 16, 32>}]} {
    %cst = arith.constant 0.000000e+00 : f32
    %0 = vector.broadcast %cst : f32 to vector<16x32xf32>
    %c0 = arith.constant 0 : index
    %c0_0 = arith.constant 0 : index
    %c0_1 = arith.constant 0 : index
    %1 = vector.load %arg1[%c0, %c0_0, %c0_1] : memref<1x18x4xf32, #tpu.memory_space<vmem>>, vector<1x16x4xf32>
    %2 = vector.shape_cast %1 : vector<1x16x4xf32> to vector<16x4xf32>
    %c0_2 = arith.constant 0 : index
    %c0_3 = arith.constant 0 : index
    %c0_4 = arith.constant 0 : index
    %3 = vector.load %arg2[%c0_2, %c0_3, %c0_4] : memref<3x4x32xf32, #tpu.memory_space<vmem>>, vector<1x4x32xf32>
    %4 = vector.shape_cast %3 : vector<1x4x32xf32> to vector<4x32xf32>
    %cst_5 = arith.constant dense<0.000000e+00> : vector<16x32xf32>
    %5 = tpu.matmul %2, %4, %cst_5 {dimension_numbers = #tpu.dot_dimension_numbers<[1], [0], [0], [1], [0, 0, 1, 1], [], []>} : vector<16x4xf32>, vector<4x32xf32>, vector<16x32xf32> -> vector<16x32xf32>
    %6 = arith.addf %0, %5 : vector<16x32xf32>
    %c0_6 = arith.constant 0 : index
    %c1 = arith.constant 1 : index
    %c0_7 = arith.constant 0 : index
    %7 = vector.load %arg1[%c0_6, %c1, %c0_7] : memref<1x18x4xf32, #tpu.memory_space<vmem>>, vector<1x16x4xf32>
    %8 = vector.shape_cast %7 : vector<1x16x4xf32> to vector<16x4xf32>
    %c1_8 = arith.constant 1 : index
    %c0_9 = arith.constant 0 : index
    %c0_10 = arith.constant 0 : index
    %9 = vector.load %arg2[%c1_8, %c0_9, %c0_10] : memref<3x4x32xf32, #tpu.memory_space<vmem>>, vector<1x4x32xf32>
    %10 = vector.shape_cast %9 : vector<1x4x32xf32> to vector<4x32xf32>
    %cst_11 = arith.constant dense<0.000000e+00> : vector<16x32xf32>
    %11 = tpu.matmul %8, %10, %cst_11 {dimension_numbers = #tpu.dot_dimension_numbers<[1], [0], [0], [1], [0, 0, 1, 1], [], []>} : vector<16x4xf32>, vector<4x32xf32>, vector<16x32xf32> -> vector<16x32xf32>
    %12 = arith.addf %6, %11 : vector<16x32xf32>
    %c0_12 = arith.constant 0 : index
    %c2 = arith.constant 2 : index
    %c0_13 = arith.constant 0 : index
    %13 = vector.load %arg1[%c0_12, %c2, %c0_13] : memref<1x18x4xf32, #tpu.memory_space<vmem>>, vector<1x16x4xf32>
    %14 = vector.shape_cast %13 : vector<1x16x4xf32> to vector<16x4xf32>
    %c2_14 = arith.constant 2 : index
    %c0_15 = arith.constant 0 : index
    %c0_16 = arith.constant 0 : index
    %15 = vector.load %arg2[%c2_14, %c0_15, %c0_16] : memref<3x4x32xf32, #tpu.memory_space<vmem>>, vector<1x4x32xf32>
    %16 = vector.shape_cast %15 : vector<1x4x32xf32> to vector<4x32xf32>
    %cst_17 = arith.constant dense<0.000000e+00> : vector<16x32xf32>
    %17 = tpu.matmul %14, %16, %cst_17 {dimension_numbers = #tpu.dot_dimension_numbers<[1], [0], [0], [1], [0, 0, 1, 1], [], []>} : vector<16x4xf32>, vector<4x32xf32>, vector<16x32xf32> -> vector<16x32xf32>
    %18 = arith.addf %12, %17 : vector<16x32xf32>
    %19 = vector.shape_cast %18 : vector<16x32xf32> to vector<1x16x32xf32>
    %c0_18 = arith.constant 0 : index
    %c0_19 = arith.constant 0 : index
    %c0_20 = arith.constant 0 : index
    %20 = vector.load %arg3[%c0_18, %c0_19, %c0_20] : memref<1x16x32xf32, #tpu.memory_space<vmem>>, vector<1x16x32xf32>
    tpu.vector_store %arg3[%c0_18, %c0_19, %c0_20], %19 {strides = array<i32>} : memref<1x16x32xf32, #tpu.memory_space<vmem>>, vector<1x16x32xf32>,
    return
  }
  func.func @transform_0(%arg0: i32) -> (i32, i32, i32) {
    %c0_i32 = arith.constant 0 : i32
    %c0_i32_0 = arith.constant 0 : i32
    %c0_i32_1 = arith.constant 0 : i32
    return %arg0, %c0_i32, %c0_i32_0 : i32, i32, i32
  }
  func.func @transform_1(%arg0: i32) -> (i32, i32, i32) {
    %c0_i32 = arith.constant 0 : i32
    %c0_i32_0 = arith.constant 0 : i32
    %c0_i32_1 = arith.constant 0 : i32
    %c0_i32_2 = arith.constant 0 : i32
    return %c0_i32, %c0_i32_0, %c0_i32_1 : i32, i32, i32
  }
  func.func @transform_2(%arg0: i32) -> (i32, i32, i32) {
    %c0_i32 = arith.constant 0 : i32
    %c0_i32_0 = arith.constant 0 : i32
    %c0_i32_1 = arith.constant 0 : i32
    return %arg0, %c0_i32, %c0_i32_0 : i32, i32, i32
  }
}

</mosaic_0001>

<llo_original>
// kernel: tpu_custom_call.1
$region0: #{tpu_custom_call.1}
  #allocation0 [shape = 'u32[]', space=smem, size = 0x4, offset = 0x4, fixed_abs, tag = 'smem constant byte address 0x4 - core index']
  #allocation1 [shape = 'u32[144,128]{1,0:T(1,128)}', space=vmem, size = 0x12000, scoped, tag = 'internal scratch']
  %s0 = inlined_call_operand.vmem [shape: f32[2,18,4], index: 0, kind: input, shape index: {}]
  %s1 = inlined_call_operand.vmem [shape: f32[3,4,32], index: 1, kind: input, shape index: {}]
  %s2 = inlined_call_operand.hbm [shape: f32[2,16,32], index: 2, kind: output, shape index: {}]
  %s3 = sld [smem:[#allocation0]]
  $region41: #{tpu_custom_call.1} parent=0
    _
  %s5 = ssub.s32 1, %s3
  %s6 = scalar_select 0, %s5, %s3
  $region1: #{tpu_custom_call.1} parent=0
    #allocation2 [shape = 'u8[16384]{0}', space=vmem, size = 0x4000, scoped, tag = 'output window, operand 0']
    #allocation3 [shape = 's32[2]{0}', space=sflag, size = 0x8, scoped, tag = 'scoped memory for tpu_custom_call.1']
    %7 = vsyncpa [#allocation3], 0
    %s8 = scalar_lea.sflag [#allocation3], 1
    %9 = vsyncpa %s8, 0
    loop: start=0, step=1, limit=4
    $region2: #{tpu_custom_call.1} parent=1 // loop_pre_header
      _
    $region3: #{tpu_custom_call.1} parent=1 // loop_header
      %s11 = sphi 0, %s15
      %p12 = scmp.ge.s32.totalorder %s11, 4
      %s21 = sphi 0, %s23
      %s24 = sphi 0, %s21
      %s25 = sphi 0, %s24
      %s41 = sphi 0, %s25
      %s45 = sphi 0, %s45
      %s47 = sphi 0, %s45
      %s48 = sphi 0, %s47
      %s62 = sphi 0, %s48
      %s68 = sphi 0, %s70
      %s71 = sphi 0, %s68
      %s72 = sphi 0, %s71
      %s88 = sphi 0, %s72
    $region4: #{tpu_custom_call.1} parent=1 // loop_header_branch
      %14 = sbr.rel (%p12) target = $region8
    $region5: #{tpu_custom_call.1} parent=1 // loop_body
      %s16 = ssub.s32 %s11, 1
      %s17 = ssub.s32 %s11, 2
      %s18 = sadd.s32 %s11, 1
      %s19 = ssub.s32 %s11, %s18
      %p20 = scmp.eq.s32.totalorder %s19, 0
      %s22 = sadd.s32 %s21, 1
      %s23 = scalar_select %p20, %s21, %s22
      %p26 = pneg %p20
      %p27 = scmp.eq.s32.totalorder %s11, 1
      %p28 = por %p26, %p27
      %p29 = scmp.ne.s32.totalorder %s21, %s24
      %p30 = scmp.eq.s32.totalorder %s11, 0
      %p31 = por %p29, %p30
      %p32 = scmp.ne.s32.totalorder %s21, %s24
      %p33 = scmp.eq.s32.totalorder %s16, 1
      %p34 = por %p32, %p33
      %p35 = scmp.ne.s32.totalorder %s24, %s25
      %p36 = scmp.eq.s32.totalorder %s16, 0
      %p37 = por %p35, %p36
      %p38 = scmp.ne.s32.totalorder %s24, %s25
      %p39 = scmp.eq.s32.totalorder %s17, 1
      %p40 = por %p38, %p39
      %p42 = scmp.ne.s32.totalorder %s25, %s41
      %p43 = scmp.eq.s32.totalorder %s17, 0
      %p44 = por %p42, %p43
      %s46 = sadd.s32 %s45, 1
      %p49 = scmp.eq.s32.totalorder %s11, 1
      %p50 = scmp.ne.s32.totalorder %s45, %s47
      %p51 = scmp.eq.s32.totalorder %s11, 0
      %p52 = por %p50, %p51
      %p53 = scmp.ne.s32.totalorder %s45, %s47
      %p54 = scmp.eq.s32.totalorder %s16, 1
      %p55 = por %p53, %p54
      %p56 = scmp.ne.s32.totalorder %s47, %s48
      %p57 = scmp.eq.s32.totalorder %s16, 0
      %p58 = por %p56, %p57
      %p59 = scmp.ne.s32.totalorder %s47, %s48
      %p60 = scmp.eq.s32.totalorder %s17, 1
      %p61 = por %p59, %p60
      %p63 = scmp.ne.s32.totalorder %s48, %s62
      %p64 = scmp.eq.s32.totalorder %s17, 0
      %p65 = por %p63, %p64
      %s66 = ssub.s32 %s11, %s18
      %p67 = scmp.eq.s32.totalorder %s66, 0
      %s69 = sadd.s32 %s68, 1
      %s70 = scalar_select %p67, %s68, %s69
      %p73 = pneg %p67
      %p74 = scmp.eq.s32.totalorder %s11, 1
      %p75 = por %p73, %p74
      %p76 = scmp.ne.s32.totalorder %s68, %s71
      %p77 = scmp.eq.s32.totalorder %s11, 0
      %p78 = por %p76, %p77
      %p79 = scmp.ne.s32.totalorder %s68, %s71
      %p80 = scmp.eq.s32.totalorder %s16, 1
      %p81 = por %p79, %p80
      %p82 = scmp.ne.s32.totalorder %s71, %s72
      %p83 = scmp.eq.s32.totalorder %s16, 0
      %p84 = por %p82, %p83
      %p85 = scmp.ne.s32.totalorder %s71, %s72
      %p86 = scmp.eq.s32.totalorder %s17, 1
      %p87 = por %p85, %p86
      %p89 = scmp.ne.s32.totalorder %s72, %s88
      %p90 = scmp.eq.s32.totalorder %s17, 0
      %p91 = por %p89, %p90
      %p92 = scmp.le.s32.totalorder 1, %s11
      %p93 = scmp.lt.s32.totalorder %s11, 3
      %p94 = pnand %p92, %p93
      %p95 = pneg %p94
      // Predicated region
      $region9: #{tpu_custom_call.1} parent=5 // pred_check
        _
      $region10: #{tpu_custom_call.1} parent=5 // pred_check_branch
        %97 = sbr.rel (%p94) target = $region12
      $region11: #{tpu_custom_call.1} parent=5 // pred_region
        %s98 = ssub.s32 %s11, 1
        // Predicated region
        $region13: #{tpu_custom_call.1} parent=11 // pred_check
          %p99 = pneg %p58
        $region14: #{tpu_custom_call.1} parent=11 // pred_check_branch
          %101 = sbr.rel (%p99) target = $region16
        $region15: #{tpu_custom_call.1} parent=11 // pred_region
          _
        $region16: #{tpu_custom_call.1} parent=11 // pred_fallthru
          _
      $region12: #{tpu_custom_call.1} parent=5 // pred_fallthru
        _
      %p102 = scmp.lt.s32.totalorder %s11, 2
      // Predicated region
      $region17: #{tpu_custom_call.1} parent=5 // pred_check
        %p103 = pneg %p102
      $region18: #{tpu_custom_call.1} parent=5 // pred_check_branch
        %105 = sbr.rel (%p103) target = $region20
      $region19: #{tpu_custom_call.1} parent=5 // pred_region
        // Predicated region
        $region21: #{tpu_custom_call.1} parent=19 // pred_check
          %p106 = pneg %p31
        $region22: #{tpu_custom_call.1} parent=19 // pred_check_branch
          %108 = sbr.rel (%p106) target = $region24
        $region23: #{tpu_custom_call.1} parent=19 // pred_region
          %p109 = scmp.lt.s32.totalorder %s11, 1
          %s110 = scalar_select %p109, %s11, 1
          %s111 = smul.addr %s110, 3
          %s112 = smul.addr %s111, 8
          %s113 = scalar_lea.vmem %s0, %s112
        $region24: #{tpu_custom_call.1} parent=19 // pred_fallthru
          _
      $region20: #{tpu_custom_call.1} parent=5 // pred_fallthru
        _
      %p114 = scmp.le.s32.totalorder 1, %s11
      %p115 = scmp.lt.s32.totalorder %s11, 3
      %p116 = pnand %p114, %p115
      %p117 = pneg %p116
      // Predicated region
      $region25: #{tpu_custom_call.1} parent=5 // pred_check
        _
      $region26: #{tpu_custom_call.1} parent=5 // pred_check_branch
        %119 = sbr.rel (%p116) target = $region28
      $region27: #{tpu_custom_call.1} parent=5 // pred_region
        %s120 = ssub.s32 %s11, 1
        %p121 = scmp.lt.s32.totalorder %s16, 1
        %s122 = scalar_select %p121, %s16, 1
        %s123 = smul.addr %s122, 3
        %s124 = smul.addr %s123, 8
        %s125 = scalar_lea.vmem %s0, %s124
        %p126 = pneg %p37
        %p127 = pneg %p34
        %p128 = pneg %p58
        %p129 = pneg %p55
        %p130 = pneg %p84
        %p131 = pneg %p81
        %s132 = sand.u32 %s71, 1
        %s133 = scalar_lea.sflag [#allocation3], %s132
        %s134 = sand.u32 %s71, 1
        %s135 = smul.addr %s134, 16
        %s136 = scalar_lea.vmem [#allocation2], %s135
        %p137 = scmp.lt.s32.totalorder %s16, 1
        %s138 = scalar_select %p137, %s16, 1
        %s139 = smul.addr %s138, 3
        %s140 = smul.addr %s139, 8
        %s141 = scalar_lea.vmem %s0, %s140
        %v142 = vld [vmem:[%s141] sm:$0xff]
        %v143 = vld [vmem:[%s141 + $0x8] sm:$0xff]
        %v144 = vld [vmem:[%s1] sm:$0xf]
        %v145 = vld [vmem:[%s141 + $0x1] sm:$0xff]
        %v146 = vld [vmem:[%s141 + $0x9] sm:$0xff]
        %s147 = scalar_lea.vmem %s1, 4
        %v148 = vld [vmem:[%s147] sm:$0xf]
        %vm149 = vcmask 31744
        %v151 = vsel %vm149, %v145, 0
        %v154 = vsel %vm149, %v146, 0
        %vm156 = vcmask 1043456
        %v158 = vsel %vm156, %v148, 0
        %160 = vmatprep.subr.mxu0 0.0
        %161 = vmatpush1.msra.mxu0 %v158
        %162 = vmatprep.subr.mxu0 0.0
        %163 = vmatpush1.msra.mxu0 0.0
        %164 = vmatprep.subr.mxu0 0.0
        %165 = vmatpush1.msra.mxu0 0.0
        %166 = vmatprep.subr.mxu0 0.0
        %167 = vmatpush1.msra.mxu0 0.0
        %168 = vmatprep.subr.mxu0 0.0
        %169 = vmatpush1.msra.mxu0 0.0
        %170 = vmatprep.subr.mxu0 0.0
        %171 = vmatpush1.msra.mxu0 0.0
        %172 = vmatprep.subr.mxu0 0.0
        %173 = vmatpush1.msra.mxu0 0.0
        %174 = vmatprep.subr.mxu0 0.0
        %175 = vmatpush1.msra.mxu0 0.0
        %176 = vmatprep.subr.mxu0 0.0
        %177 = vmatpush1.msra.mxu0 0.0
        %178 = vmatprep.subr.mxu0 0.0
        %179 = vmatpush1.msra.mxu0 0.0
        %180 = vmatprep.subr.mxu0 0.0
        %181 = vmatpush1.msra.mxu0 0.0
        %182 = vmatprep.subr.mxu0 0.0
        %183 = vmatpush1.msra.mxu0 0.0
        %184 = vmatprep.subr.mxu0 0.0
        %185 = vmatpush1.msra.mxu0 0.0
        %186 = vmatprep.subr.mxu0 0.0
        %187 = vmatpush1.msra.mxu0 0.0
        %188 = vmatprep.subr.mxu0 0.0
        %189 = vmatpush1.msra.mxu0 0.0
        %190 = vmatprep.subr.mxu0 0.0
        %191 = vmatpush1.msra.mxu0 0.0
        %192 = vmatprep.subr.mxu0 0.0
        %193 = vmatpush1.msra.mxu0 0.0
        %194 = vmatprep.subr.mxu0 0.0
        %195 = vmatpush1.msra.mxu0 0.0
        %196 = vmatprep.subr.mxu0 0.0
        %197 = vmatpush1.msra.mxu0 0.0
        %198 = vmatprep.subr.mxu0 0.0
        %199 = vmatpush1.msra.mxu0 0.0
        %200 = vmatprep.subr.mxu0 0.0
        %201 = vmatpush1.msra.mxu0 0.0
        %202 = vmatprep.subr.mxu0 0.0
        %203 = vmatpush1.msra.mxu0 0.0
        %204 = vmatprep.subr.mxu0 0.0
        %205 = vmatpush1.msra.mxu0 0.0
        %206 = vmatprep.subr.mxu0 0.0
        %207 = vmatpush1.msra.mxu0 0.0
        %208 = vmatprep.subr.mxu0 0.0
        %209 = vmatpush1.msra.mxu0 0.0
        %210 = vmatprep.subr.mxu0 0.0
        %211 = vmatpush1.msra.mxu0 0.0
        %212 = vmatprep.subr.mxu0 0.0
        %213 = vmatpush1.msra.mxu0 0.0
        %214 = vmatprep.subr.mxu0 0.0
        %215 = vmatpush1.msra.mxu0 0.0
        %216 = vmatprep.subr.mxu0 0.0
        %217 = vmatpush1.msra.mxu0 0.0
        %218 = vmatprep.subr.mxu0 0.0
        %219 = vmatpush1.msra.mxu0 0.0
        %220 = vmatprep.subr.mxu0 0.0
        %221 = vmatpush1.msra.mxu0 0.0
        %222 = vmatprep.subr.mxu0 0.0
        %223 = vmatpush1.msra.mxu0 0.0
        %224 = vmatprep.mubr.f32.mxu0 0.0
        %225 = vmatmul.mubr.f32.gmra.mrb[0].mxu0 %v151
        %v226 = vpop.f32.mrb[0].mxu0
        %v227 = vadd.f32 0.0, %v226
        %v228 = vpop.f32.mrb[0].mxu0
        %229 = vmatprep.mubr.f32.mxu0 0.0
        %230 = vmatmul.mubr.f32.gmra.mrb[0].mxu0 %v154
        %v231 = vpop.f32.mrb[0].mxu0
        %v232 = vadd.f32 0.0, %v231
        %v233 = vpop.f32.mrb[0].mxu0
        %234 = vdwg.mxu0
        %v236 = vsel %vm149, %v142, 0
        %v239 = vsel %vm149, %v143, 0
        %v242 = vsel %vm156, %v144, 0
        %244 = vmatprep.subr.mxu0 0.0
        %245 = vmatpush1.msra.mxu0 %v242
        %246 = vmatprep.subr.mxu0 0.0
        %247 = vmatpush1.msra.mxu0 0.0
        %248 = vmatprep.subr.mxu0 0.0
        %249 = vmatpush1.msra.mxu0 0.0
        %250 = vmatprep.subr.mxu0 0.0
        %251 = vmatpush1.msra.mxu0 0.0
        %252 = vmatprep.subr.mxu0 0.0
        %253 = vmatpush1.msra.mxu0 0.0
        %254 = vmatprep.subr.mxu0 0.0
        %255 = vmatpush1.msra.mxu0 0.0
        %256 = vmatprep.subr.mxu0 0.0
        %257 = vmatpush1.msra.mxu0 0.0
        %258 = vmatprep.subr.mxu0 0.0
        %259 = vmatpush1.msra.mxu0 0.0
        %260 = vmatprep.subr.mxu0 0.0
        %261 = vmatpush1.msra.mxu0 0.0
        %262 = vmatprep.subr.mxu0 0.0
        %263 = vmatpush1.msra.mxu0 0.0
        %264 = vmatprep.subr.mxu0 0.0
        %265 = vmatpush1.msra.mxu0 0.0
        %266 = vmatprep.subr.mxu0 0.0
        %267 = vmatpush1.msra.mxu0 0.0
        %268 = vmatprep.subr.mxu0 0.0
        %269 = vmatpush1.msra.mxu0 0.0
        %270 = vmatprep.subr.mxu0 0.0
        %271 = vmatpush1.msra.mxu0 0.0
        %272 = vmatprep.subr.mxu0 0.0
        %273 = vmatpush1.msra.mxu0 0.0
        %274 = vmatprep.subr.mxu0 0.0
        %275 = vmatpush1.msra.mxu0 0.0
        %276 = vmatprep.subr.mxu0 0.0
        %277 = vmatpush1.msra.mxu0 0.0
        %278 = vmatprep.subr.mxu0 0.0
        %279 = vmatpush1.msra.mxu0 0.0
        %280 = vmatprep.subr.mxu0 0.0
        %281 = vmatpush1.msra.mxu0 0.0
        %282 = vmatprep.subr.mxu0 0.0
        %283 = vmatpush1.msra.mxu0 0.0
        %284 = vmatprep.subr.mxu0 0.0
        %285 = vmatpush1.msra.mxu0 0.0
        %286 = vmatprep.subr.mxu0 0.0
        %287 = vmatpush1.msra.mxu0 0.0
        %288 = vmatprep.subr.mxu0 0.0
        %289 = vmatpush1.msra.mxu0 0.0
        %290 = vmatprep.subr.mxu0 0.0
        %291 = vmatpush1.msra.mxu0 0.0
        %292 = vmatprep.subr.mxu0 0.0
        %293 = vmatpush1.msra.mxu0 0.0
        %294 = vmatprep.subr.mxu0 0.0
        %295 = vmatpush1.msra.mxu0 0.0
        %296 = vmatprep.subr.mxu0 0.0
        %297 = vmatpush1.msra.mxu0 0.0
        %298 = vmatprep.subr.mxu0 0.0
        %299 = vmatpush1.msra.mxu0 0.0
        %300 = vmatprep.subr.mxu0 0.0
        %301 = vmatpush1.msra.mxu0 0.0
        %302 = vmatprep.subr.mxu0 0.0
        %303 = vmatpush1.msra.mxu0 0.0
        %304 = vmatprep.subr.mxu0 0.0
        %305 = vmatpush1.msra.mxu0 0.0
        %306 = vmatprep.subr.mxu0 0.0
        %307 = vmatpush1.msra.mxu0 0.0
        %308 = vmatprep.mubr.f32.mxu0 0.0
        %309 = vmatmul.mubr.f32.gmra.mrb[0].mxu0 %v236
        %v310 = vpop.f32.mrb[0].mxu0
        %v311 = vadd.f32 %v227, %v310
        %v312 = vpop.f32.mrb[0].mxu0
        %313 = vmatprep.mubr.f32.mxu0 0.0
        %314 = vmatmul.mubr.f32.gmra.mrb[0].mxu0 %v239
        %v315 = vpop.f32.mrb[0].mxu0
        %v316 = vadd.f32 %v232, %v315
        %v317 = vpop.f32.mrb[0].mxu0
        %318 = vdwg.mxu0
        %v319 = vld [vmem:[%s141 + $0x2] sm:$0xff]
        %v320 = vld [vmem:[%s141 + $0xa] sm:$0xff]
        %s321 = scalar_lea.vmem %s1, 8
        %v322 = vld [vmem:[%s321] sm:$0xf]
        %v324 = vsel %vm149, %v319, 0
        %v327 = vsel %vm149, %v320, 0
        %v330 = vsel %vm156, %v322, 0
        %332 = vmatprep.subr.mxu0 0.0
        %333 = vmatpush1.msra.mxu0 %v330
        %334 = vmatprep.subr.mxu0 0.0
        %335 = vmatpush1.msra.mxu0 0.0
        %336 = vmatprep.subr.mxu0 0.0
        %337 = vmatpush1.msra.mxu0 0.0
        %338 = vmatprep.subr.mxu0 0.0
        %339 = vmatpush1.msra.mxu0 0.0
        %340 = vmatprep.subr.mxu0 0.0
        %341 = vmatpush1.msra.mxu0 0.0
        %342 = vmatprep.subr.mxu0 0.0
        %343 = vmatpush1.msra.mxu0 0.0
        %344 = vmatprep.subr.mxu0 0.0
        %345 = vmatpush1.msra.mxu0 0.0
        %346 = vmatprep.subr.mxu0 0.0
        %347 = vmatpush1.msra.mxu0 0.0
        %348 = vmatprep.subr.mxu0 0.0
        %349 = vmatpush1.msra.mxu0 0.0
        %350 = vmatprep.subr.mxu0 0.0
        %351 = vmatpush1.msra.mxu0 0.0
        %352 = vmatprep.subr.mxu0 0.0
        %353 = vmatpush1.msra.mxu0 0.0
        %354 = vmatprep.subr.mxu0 0.0
        %355 = vmatpush1.msra.mxu0 0.0
        %356 = vmatprep.subr.mxu0 0.0
        %357 = vmatpush1.msra.mxu0 0.0
        %358 = vmatprep.subr.mxu0 0.0
        %359 = vmatpush1.msra.mxu0 0.0
        %360 = vmatprep.subr.mxu0 0.0
        %361 = vmatpush1.msra.mxu0 0.0
        %362 = vmatprep.subr.mxu0 0.0
        %363 = vmatpush1.msra.mxu0 0.0
        %364 = vmatprep.subr.mxu0 0.0
        %365 = vmatpush1.msra.mxu0 0.0
        %366 = vmatprep.subr.mxu0 0.0
        %367 = vmatpush1.msra.mxu0 0.0
        %368 = vmatprep.subr.mxu0 0.0
        %369 = vmatpush1.msra.mxu0 0.0
        %370 = vmatprep.subr.mxu0 0.0
        %371 = vmatpush1.msra.mxu0 0.0
        %372 = vmatprep.subr.mxu0 0.0
        %373 = vmatpush1.msra.mxu0 0.0
        %374 = vmatprep.subr.mxu0 0.0
        %375 = vmatpush1.msra.mxu0 0.0
        %376 = vmatprep.subr.mxu0 0.0
        %377 = vmatpush1.msra.mxu0 0.0
        %378 = vmatprep.subr.mxu0 0.0
        %379 = vmatpush1.msra.mxu0 0.0
        %380 = vmatprep.subr.mxu0 0.0
        %381 = vmatpush1.msra.mxu0 0.0
        %382 = vmatprep.subr.mxu0 0.0
        %383 = vmatpush1.msra.mxu0 0.0
        %384 = vmatprep.subr.mxu0 0.0
        %385 = vmatpush1.msra.mxu0 0.0
        %386 = vmatprep.subr.mxu0 0.0
        %387 = vmatpush1.msra.mxu0 0.0
        %388 = vmatprep.subr.mxu0 0.0
        %389 = vmatpush1.msra.mxu0 0.0
        %390 = vmatprep.subr.mxu0 0.0
        %391 = vmatpush1.msra.mxu0 0.0
        %392 = vmatprep.subr.mxu0 0.0
        %393 = vmatpush1.msra.mxu0 0.0
        %394 = vmatprep.subr.mxu0 0.0
        %395 = vmatpush1.msra.mxu0 0.0
        %396 = vmatprep.mubr.f32.mxu0 0.0
        %397 = vmatmul.mubr.f32.gmra.mrb[0].mxu0 %v324
        %v398 = vpop.f32.mrb[0].mxu0
        %v399 = vadd.f32 0.0, %v398
        %v400 = vpop.f32.mrb[0].mxu0
        %401 = vmatprep.mubr.f32.mxu0 0.0
        %402 = vmatmul.mubr.f32.gmra.mrb[0].mxu0 %v327
        %v403 = vpop.f32.mrb[0].mxu0
        %v404 = vadd.f32 0.0, %v403
        %v405 = vpop.f32.mrb[0].mxu0
        %406 = vdwg.mxu0
        %v407 = vadd.f32 %v311, %v399
        %v408 = vadd.f32 %v316, %v404
        %vm409 = vcmask 261120
        %410 = vst.msk [vmem:[%s136] sm:$0xff] %vm409, %v407
        %411 = vst.msk [vmem:[%s136 + $0x8] sm:$0xff] %vm409, %v408
        %s412 = sand.u32 %s71, 1
        %s413 = scalar_lea.sflag [#allocation3], %s412
        %s414 = sand.u32 %s71, 1
        %s415 = smul.addr %s414, 16
        %s416 = scalar_lea.vmem [#allocation2], %s415
        // Predicated region
        $region29: #{tpu_custom_call.1} parent=27 // pred_check
          %p417 = pneg %p81
        $region30: #{tpu_custom_call.1} parent=27 // pred_check_branch
          %419 = sbr.rel (%p417) target = $region32
        $region31: #{tpu_custom_call.1} parent=27 // pred_region
          %s421 = ssub.s32 256, 256
          %422 = vsyncadd %s413, %s421
          %s423 = smul.addr %s16, 2
          %s424 = smul.addr %s423, 128
          %s425 = scalar_lea.hbm %s2, %s424
          %s426 = sshll.u32 %s416, 4
          %s427 = int_to_ptr.vmem [resolvable:$true] %s426
          %432 = dma.vmem_to_hbm [thread:$0]  %s427, 256, %s425, %s413, 128, 128, 8
        $region32: #{tpu_custom_call.1} parent=27 // pred_fallthru
          _
      $region28: #{tpu_custom_call.1} parent=5 // pred_fallthru
        _
      %p433 = scmp.le.s32.totalorder 2, %s11
      // Predicated region
      $region33: #{tpu_custom_call.1} parent=5 // pred_check
        %p434 = pneg %p433
      $region34: #{tpu_custom_call.1} parent=5 // pred_check_branch
        %436 = sbr.rel (%p434) target = $region36
      $region35: #{tpu_custom_call.1} parent=5 // pred_region
        %s437 = ssub.s32 %s11, 2
        // Predicated region
        $region37: #{tpu_custom_call.1} parent=35 // pred_check
          %p438 = pneg %p87
        $region38: #{tpu_custom_call.1} parent=35 // pred_check_branch
          %440 = sbr.rel (%p438) target = $region40
        $region39: #{tpu_custom_call.1} parent=35 // pred_region
          %s441 = sand.u32 %s72, 1
          %s442 = scalar_lea.sflag [#allocation3], %s441
          %s443 = sand.u32 %s72, 1
          %s444 = smul.addr %s443, 16
          %s445 = scalar_lea.vmem [#allocation2], %s444
          %446 = dma.done %s442, 256
        $region40: #{tpu_custom_call.1} parent=35 // pred_fallthru
          _
      $region36: #{tpu_custom_call.1} parent=5 // pred_fallthru
        _
    $region6: #{tpu_custom_call.1} parent=1 // loop_footer
      %s15 = sadd.s32 1, %s11
    $region7: #{tpu_custom_call.1} parent=1 // loop_footer_branch
      %10 = sbr.rel target = $region3
    $region8: #{tpu_custom_call.1} parent=1 // loop_exit
      _
    %447 = vsyncpa [#allocation3], 1
    %s448 = scalar_lea.sflag [#allocation3], 1
    %449 = vsyncpa %s448, 1

</llo_original>
